<compile_context>
chip_gen: v6e
topology: v6e:2x2x1
jax: 0.10.0
libtpu: 0.0.40
codegen_flags: <defaults>
</compile_context>

<pallas_src>
import functools

import jax
import jax.numpy as jnp
from jax import lax
from jax.experimental import pallas as pl
from jax.experimental.pallas import tpu as pltpu

FEAT = 12                    # the module hard-codes [:, :12]
MAX_TILE_B = 8192            # rows per block
SMALL_FALLBACK_ELEMS = 1024  # below ~1 vreg of work, use the fused XLA path


def _round_up(x, m):
    return ((x + m - 1) // m) * m


def _sublane_multiple(*dtypes):
    # Sub-32-bit dtypes pack along sublanes: 8 rows (f32), 16 (bf16), 32 (int8/fp8).
    need = 8
    for dt in dtypes:
        item = jnp.dtype(dt).itemsize
        need = max(need, 8 * max(1, 4 // item))
    return need


def _custom_loss_kernel(logits_ref, label_ref, ogx_ref, out_ref, *,
                        n_rows, tile_b, tiles_per_chunk):
    c = pl.program_id(0)     # parallel chunk (row-range) index
    t = pl.program_id(1)     # reduction step inside the chunk

    @pl.when(t == 0)
    def _init():
        out_ref[...] = jnp.zeros_like(out_ref)

    # Native-dtype loads, f32 math (free upcast on the VPU).
    logits = logits_ref[...].astype(jnp.float32)      # (tile_b, FEAT)
    label = label_ref[...].astype(jnp.float32)
    ogx = ogx_ref[:, :FEAT].astype(jnp.float32)       # drop extra og_x features

    # mask = sigmoid(logits) > 0.5  <=>  logits > 0
    sel = jnp.where(logits > 0.0, ogx, 0.0)

    true_mask = label > 0.001
    safe_label = jnp.where(true_mask, label, 1.0)
    diff = sel - label
    # divide -> EUP reciprocal (keeps VALU slots free; kernel is DMA-bound)
    loss_pos = diff * diff * pl.reciprocal(safe_label, approx=False)
    loss_neg = sel * sel
    per_elem = jnp.where(true_mask, loss_pos, loss_neg)

    # Mask rows past B: covers the ragged last block and any overshoot grid
    # slot (whose index_map was clamped to a valid block index).
    block_idx = c * tiles_per_chunk + t               # intended, unclamped
    row = block_idx * tile_b + lax.broadcasted_iota(jnp.int32, per_elem.shape, 0)
    per_elem = jnp.where(row < n_rows, per_elem, 0.0)

    # Lane-wise partial sum into the resident per-chunk accumulator block:
    # vreg adds across row groups + one small sublane reduce per step; no
    # scalar store, no divide here (finalize happens once in the wrapper).
    out_ref[...] += jnp.sum(per_elem, axis=0, keepdims=True)[None, :, :]


def custom_loss(logits, label, og_x, *, use_pallas=None, max_tile_b=MAX_TILE_B):
    """logits, label: (B, 12[, 1]); og_x: (B, F[, 1]) with F >= 12."""
    B = logits.shape[0]
    total = B * FEAT

    if use_pallas is None:
        use_pallas = total >= SMALL_FALLBACK_ELEMS
    if not use_pallas:
        # Launch overhead dominates at tiny sizes; let XLA fuse the elementwise path.
        return _reference_loss(logits, label, og_x)

    # Free reshapes (drop trailing size-1 dim), keep native dtypes -> no HBM pass.
    logits2d = logits.reshape(B, FEAT)
    label2d = label.reshape(B, FEAT)
    ogx2d = og_x.reshape(B, -1)
    f_dim = ogx2d.shape[1]

    sub = _sublane_multiple(logits.dtype, label.dtype, og_x.dtype)

    # Tile count first, then size: balanced blocks, no pathological padding.
    n_target = pl.cdiv(B, max_tile_b)
    tile_b = _round_up(pl.cdiv(B, n_target), sub)
    if tile_b >= B:
        tile_b = B                      # single block == full dim (always legal)
    nblocks = pl.cdiv(B, tile_b)

    # Outer "parallel" axis lets v7x spread the row range across its 2 TCs.
    num_chunks = 2 if nblocks >= 2 else 1
    tiles_per_chunk = pl.cdiv(nblocks, num_chunks)

    def row_block(c, t):
        # Clamp overshoot slots to a valid block; the in-kernel row mask zeroes them.
        return (jnp.minimum(c * tiles_per_chunk + t, nblocks - 1), 0)

    kernel = functools.partial(
        _custom_loss_kernel,
        n_rows=B, tile_b=tile_b, tiles_per_chunk=tiles_per_chunk)

    partials = pl.pallas_call(
        kernel,
        out_shape=jax.ShapeDtypeStruct((num_chunks, 1, FEAT), jnp.float32),
        grid_spec=pltpu.PrefetchScalarGridSpec(
            num_scalar_prefetch=0,
            grid=(num_chunks, tiles_per_chunk),
            in_specs=[
                pl.BlockSpec((tile_b, FEAT), row_block),
                pl.BlockSpec((tile_b, FEAT), row_block),
                pl.BlockSpec((tile_b, f_dim), row_block),
            ],
            out_specs=pl.BlockSpec((1, 1, FEAT), lambda c, t: (c, 0, 0)),
        ),
        compiler_params=pltpu.CompilerParams(
            dimension_semantics=("parallel", "arbitrary"),
        ),
    )(logits2d, label2d, ogx2d)

    # Cross-lane / cross-chunk reduce + constant 1/N multiply, once, outside the grid.
    return jnp.sum(partials) * (1.0 / total)


def _reference_loss(logits, label, og_x):
    """Pure-JAX reference mirroring the PyTorch forward (f32 math)."""
    B = logits.shape[0]
    logits = logits.reshape(B, FEAT).astype(jnp.float32)
    label = label.reshape(B, FEAT).astype(jnp.float32)
    ogx = og_x.reshape(B, -1)[:, :FEAT].astype(jnp.float32)
    sel = jnp.where(jax.nn.sigmoid(logits) > 0.5, ogx, 0.0)
    true_mask = label > 0.001
    safe_label = jnp.where(true_mask, label, 1.0)
    per_elem = jnp.where(true_mask, (sel - label) ** 2 / safe_label, sel ** 2)
    return jnp.sum(per_elem) / per_elem.size


if __name__ == "__main__":
    key = jax.random.PRNGKey(0)

    def make_inputs(k, batch, feats, dtype):
        k1, k2, k3 = jax.random.split(k, 3)
        logits = jax.random.normal(k1, (batch, FEAT, 1)).astype(dtype)
        label = jax.random.uniform(k2, (batch, FEAT, 1),
                                   minval=-0.5, maxval=1.0).astype(dtype)
        og_x = jax.random.normal(k3, (batch, feats, 1)).astype(dtype)
        return logits, label, og_x

    k1, k2, k3, k4 = jax.random.split(key, 4)

    # 1) tiny batch forced through the kernel: single (equal-full-dim) block + row mask
    logits, label, og_x = make_inputs(k1, 2, 16, jnp.float32)
    out = custom_loss(logits, label, og_x, use_pallas=True)
    jax.block_until_ready(out)
    ref = _reference_loss(logits, label, og_x)
    assert jnp.allclose(out, ref, rtol=1e-5, atol=1e-6), ("tiny", out, ref)

    # 2) multi-block: 2 parallel chunks, overshoot grid slot, ragged tail block
    logits, label, og_x = make_inputs(k2, 300, 16, jnp.float32)
    out = custom_loss(logits, label, og_x, use_pallas=True, max_tile_b=64)
    jax.block_until_ready(out)
    ref = _reference_loss(logits, label, og_x)
    assert jnp.allclose(out, ref, rtol=1e-5, atol=1e-6), ("multi", out, ref)

    # 3) bf16 inputs: 16-row sublane packing path, f32 math in-kernel
    logits, label, og_x = make_inputs(k3, 300, 16, jnp.bfloat16)
    out = custom_loss(logits, label, og_x, use_pallas=True, max_tile_b=64)
    jax.block_until_ready(out)
    ref = _reference_loss(logits, label, og_x)
    assert jnp.allclose(out, ref, rtol=1e-4, atol=1e-5), ("bf16", out, ref)

    # 4) auto mode on a tiny batch routes to the fused XLA fallback
    logits, label, og_x = make_inputs(k4, 2, 16, jnp.float32)
    out = custom_loss(logits, label, og_x)
    jax.block_until_ready(out)
    ref = _reference_loss(logits, label, og_x)
    assert jnp.allclose(out, ref, rtol=1e-5, atol=1e-6), ("fallback", out, ref)

    print("KERNEL_OK")
</pallas_src>

<mosaic_0001>
module attributes {stable_mosaic.version = 11 : i64} {
  func.func @_custom_loss_kernel(%arg0: i32, %arg1: i32, %arg2: memref<2x12xf32, #tpu.memory_space<vmem>>, %arg3: memref<2x12xf32, #tpu.memory_space<vmem>>, %arg4: memref<2x16xf32, #tpu.memory_space<vmem>>, %arg5: memref<1x1x12xf32, #tpu.memory_space<vmem>>) attributes {dimension_semantics = [#tpu.dimension_semantics<parallel>, #tpu.dimension_semantics<arbitrary>], iteration_bounds = array<i64: 1, 1>, scalar_prefetch = 0 : i64, scratch_operands = 0 : i64, tpu.core_type = #tpu.core_type<tc>, window_params = [{transform_indices = @transform_0, window_bounds = array<i64: 2, 12>}, {transform_indices = @transform_1, window_bounds = array<i64: 2, 12>}, {transform_indices = @transform_2, window_bounds = array<i64: 2, 16>}, {transform_indices = @transform_3, window_bounds = array<i64: 1, 1, 12>}]} {
    %c0_i32 = arith.constant 0 : i32
    %0 = arith.cmpi eq, %arg1, %c0_i32 : i32
    %1 = arith.extui %0 : i1 to i32
    %c0_i32_0 = arith.constant 0 : i32
    %2 = arith.cmpi ne, %1, %c0_i32_0 : i32
    scf.if %2 {
      %cst_18 = arith.constant 0.000000e+00 : f32
      %36 = vector.broadcast %cst_18 : f32 to vector<1x1x12xf32>
      %c0_19 = arith.constant 0 : index
      %c0_20 = arith.constant 0 : index
      %c0_21 = arith.constant 0 : index
      %37 = vector.load %arg5[%c0_19, %c0_20, %c0_21] : memref<1x1x12xf32, #tpu.memory_space<vmem>>, vector<1x1x12xf32>
      tpu.vector_store %arg5[%c0_19, %c0_20, %c0_21], %36 {strides = array<i32>} : memref<1x1x12xf32, #tpu.memory_space<vmem>>, vector<1x1x12xf32>,
    } else {
    }
    %c0 = arith.constant 0 : index
    %c0_1 = arith.constant 0 : index
    %3 = vector.load %arg2[%c0, %c0_1] : memref<2x12xf32, #tpu.memory_space<vmem>>, vector<2x12xf32>
    %c0_2 = arith.constant 0 : index
    %c0_3 = arith.constant 0 : index
    %4 = vector.load %arg3[%c0_2, %c0_3] : memref<2x12xf32, #tpu.memory_space<vmem>>, vector<2x12xf32>
    %c0_4 = arith.constant 0 : index
    %c0_5 = arith.constant 0 : index
    %5 = vector.load %arg4[%c0_4, %c0_5] : memref<2x16xf32, #tpu.memory_space<vmem>>, vector<2x12xf32>
    %cst = arith.constant 0.000000e+00 : f32
    %6 = vector.broadcast %cst : f32 to vector<2x12xf32>
    %7 = arith.cmpf ogt, %3, %6 : vector<2x12xf32>
    %cst_6 = arith.constant 0.000000e+00 : f32
    %8 = vector.broadcast %cst_6 : f32 to vector<2x12xf32>
    %9 = arith.select %7, %5, %8 : vector<2x12xi1>, vector<2x12xf32>
    %cst_7 = arith.constant 1.000000e-03 : f32
    %10 = vector.broadcast %cst_7 : f32 to vector<2x12xf32>
    %11 = arith.cmpf ogt, %4, %10 : vector<2x12xf32>
    %cst_8 = arith.constant 1.000000e+00 : f32
    %12 = vector.broadcast %cst_8 : f32 to vector<2x12xf32>
    %13 = arith.select %11, %4, %12 : vector<2x12xi1>, vector<2x12xf32>
    %14 = arith.subf %9, %4 : vector<2x12xf32>
    %15 = arith.mulf %14, %14 : vector<2x12xf32>
    %16 = tpu.reciprocal %13 : vector<2x12xf32> -> vector<2x12xf32>
    %17 = arith.mulf %15, %16 : vector<2x12xf32>
    %18 = arith.mulf %9, %9 : vector<2x12xf32>
    %19 = arith.select %11, %17, %18 : vector<2x12xi1>, vector<2x12xf32>
    %c1_i32 = arith.constant 1 : i32
    %20 = arith.muli %arg0, %c1_i32 : i32
    %21 = arith.addi %20, %arg1 : i32
    %c2_i32 = arith.constant 2 : i32
    %22 = arith.muli %21, %c2_i32 : i32
    %23 = tpu.iota {dimensions = array<i32: 0>} : vector<2x12xi32>
    %24 = vector.broadcast %22 : i32 to vector<2x12xi32>
    %25 = arith.addi %24, %23 : vector<2x12xi32>
    %c2_i32_9 = arith.constant 2 : i32
    %26 = vector.broadcast %c2_i32_9 : i32 to vector<2x12xi32>
    %27 = arith.cmpi slt, %25, %26 : vector<2x12xi32>
    %cst_10 = arith.constant 0.000000e+00 : f32
    %28 = vector.broadcast %cst_10 : f32 to vector<2x12xf32>
    %29 = arith.select %27, %19, %28 : vector<2x12xi1>, vector<2x12xf32>
    %c0_11 = arith.constant 0 : index
    %c0_12 = arith.constant 0 : index
    %c0_13 = arith.constant 0 : index
    %30 = vector.load %arg5[%c0_11, %c0_12, %c0_13] : memref<1x1x12xf32, #tpu.memory_space<vmem>>, vector<1x1x12xf32>
    %cst_14 = arith.constant dense<0.000000e+00> : vector<12xf32>
    %31 = vector.multi_reduction <add>, %29, %cst_14 [0] : vector<2x12xf32> to vector<12xf32>
    %32 = vector.shape_cast %31 : vector<12xf32> to vector<1x12xf32>
    %33 = vector.shape_cast %32 : vector<1x12xf32> to vector<1x1x12xf32>
    %34 = arith.addf %30, %33 : vector<1x1x12xf32>
    %c0_15 = arith.constant 0 : index
    %c0_16 = arith.constant 0 : index
    %c0_17 = arith.constant 0 : index
    %35 = vector.load %arg5[%c0_15, %c0_16, %c0_17] : memref<1x1x12xf32, #tpu.memory_space<vmem>>, vector<1x1x12xf32>
    tpu.vector_store %arg5[%c0_15, %c0_16, %c0_17], %34 {strides = array<i32>} : memref<1x1x12xf32, #tpu.memory_space<vmem>>, vector<1x1x12xf32>,
    return
  }
  func.func @transform_0(%arg0: i32, %arg1: i32) -> (i32, i32) {
    %c1_i32 = arith.constant 1 : i32
    %0 = arith.muli %arg0, %c1_i32 : i32
    %1 = arith.addi %0, %arg1 : i32
    %c0_i32 = arith.constant 0 : i32
    %2 = arith.minsi %1, %c0_i32 : i32
    %c0_i32_0 = arith.constant 0 : i32
    %c0_i32_1 = arith.constant 0 : i32
    return %2, %c0_i32_0 : i32, i32
  }
  func.func @transform_1(%arg0: i32, %arg1: i32) -> (i32, i32) {
    %c1_i32 = arith.constant 1 : i32
    %0 = arith.muli %arg0, %c1_i32 : i32
    %1 = arith.addi %0, %arg1 : i32
    %c0_i32 = arith.constant 0 : i32
    %2 = arith.minsi %1, %c0_i32 : i32
    %c0_i32_0 = arith.constant 0 : i32
    %c0_i32_1 = arith.constant 0 : i32
    return %2, %c0_i32_0 : i32, i32
  }
  func.func @transform_2(%arg0: i32, %arg1: i32) -> (i32, i32) {
    %c1_i32 = arith.constant 1 : i32
    %0 = arith.muli %arg0, %c1_i32 : i32
    %1 = arith.addi %0, %arg1 : i32
    %c0_i32 = arith.constant 0 : i32
    %2 = arith.minsi %1, %c0_i32 : i32
    %c0_i32_0 = arith.constant 0 : i32
    %c0_i32_1 = arith.constant 0 : i32
    return %2, %c0_i32_0 : i32, i32
  }
  func.func @transform_3(%arg0: i32, %arg1: i32) -> (i32, i32, i32) {
    %c0_i32 = arith.constant 0 : i32
    %c0_i32_0 = arith.constant 0 : i32
    %c0_i32_1 = arith.constant 0 : i32
    return %arg0, %c0_i32, %c0_i32_0 : i32, i32, i32
  }
}

</mosaic_0001>

<llo_original>
// kernel: tpu_custom_call.1
$region0: #{tpu_custom_call.1}
  #allocation0 [shape = 'u32[]', space=smem, size = 0x4, offset = 0x4, fixed_abs, tag = 'smem constant byte address 0x4 - core index']
  #allocation1 [shape = 'u32[144,128]{1,0:T(1,128)}', space=vmem, size = 0x12000, scoped, tag = 'internal scratch']
  %s0 = inlined_call_operand.hbm [shape: f32[2,12], index: 0, kind: input, shape index: {}]
  %s1 = inlined_call_operand.hbm [shape: f32[2,12], index: 1, kind: input, shape index: {}]
  %s2 = inlined_call_operand.vmem [shape: f32[2,16], index: 2, kind: input, shape index: {}]
  %s3 = inlined_call_operand.hbm [shape: f32[1,1,12], index: 3, kind: output, shape index: {}]
  %s4 = sld [smem:[#allocation0]]
  $region34: #{tpu_custom_call.1} parent=0
    _
  %s6 = ssub.s32 1, %s4
  %s7 = scalar_select 0, %s6, %s4
  $region1: #{tpu_custom_call.1} parent=0
    #allocation2 [shape = 'u8[1024]{0}', space=vmem, size = 0x400, scoped, tag = 'input window, operand 0, single buffered']
    #allocation3 [shape = 's32[1]{0}', space=sflag, size = 0x4, scoped, tag = 'scoped memory for tpu_custom_call.1']
    #allocation4 [shape = 's32[1]{0}', space=sflag, size = 0x4, scoped, tag = 'scoped memory for tpu_custom_call.1']
    #allocation5 [shape = 'u8[1024]{0}', space=vmem, size = 0x400, scoped, tag = 'input window, operand 1, single buffered']
    #allocation6 [shape = 's32[1]{0}', space=sflag, size = 0x4, scoped, tag = 'scoped memory for tpu_custom_call.1']
    #allocation7 [shape = 'u8[512]{0}', space=vmem, size = 0x400, scoped, tag = 'output window, operand 0, single buffered']
    %8 = vsyncpa [#allocation3], 0
    %9 = vsyncpa [#allocation6], 0
    %10 = vsyncpa [#allocation4], 0
    // Predicated region
    $region2: #{tpu_custom_call.1} parent=1 // pred_check
      _
    $region3: #{tpu_custom_call.1} parent=1 // pred_check_branch
      %12 = sbr.rel (0) target = $region5
    $region4: #{tpu_custom_call.1} parent=1 // pred_region
      %s13 = sadd.s32 0, 0
      %p14 = scmp.lt.s32.totalorder %s13, 0
      %s15 = scalar_select %p14, %s13, 0
      %s17 = ssub.s32 32, 32
      %18 = vsyncadd [#allocation3], %s17
      %s19 = smul.addr %s15, 32
      %s20 = scalar_lea.hbm %s0, %s19
      %s22 = sshll.u32 [#allocation2], 4
      %s23 = int_to_ptr.vmem [resolvable:$true] %s22
      %25 = dma.hbm_to_vmem [thread:$0]  %s20, 32, %s23, [#allocation3]
    $region5: #{tpu_custom_call.1} parent=1 // pred_fallthru
      _
    // Predicated region
    $region6: #{tpu_custom_call.1} parent=1 // pred_check
      _
    $region7: #{tpu_custom_call.1} parent=1 // pred_check_branch
      %27 = sbr.rel (0) target = $region9
    $region8: #{tpu_custom_call.1} parent=1 // pred_region
      %s28 = sadd.s32 0, 0
      %p29 = scmp.lt.s32.totalorder %s28, 0
      %s30 = scalar_select %p29, %s28, 0
      %s32 = ssub.s32 32, 32
      %33 = vsyncadd [#allocation6], %s32
      %s34 = smul.addr %s30, 32
      %s35 = scalar_lea.hbm %s1, %s34
      %s37 = sshll.u32 [#allocation5], 4
      %s38 = int_to_ptr.vmem [resolvable:$true] %s37
      %40 = dma.hbm_to_vmem [thread:$0]  %s35, 32, %s38, [#allocation6]
    $region9: #{tpu_custom_call.1} parent=1 // pred_fallthru
      _
    // Predicated region
    $region10: #{tpu_custom_call.1} parent=1 // pred_check
      _
    $region11: #{tpu_custom_call.1} parent=1 // pred_check_branch
      %42 = sbr.rel (0) target = $region13
    $region12: #{tpu_custom_call.1} parent=1 // pred_region
      %s43 = sadd.s32 0, 0
      %p44 = scmp.lt.s32.totalorder %s43, 0
      %s45 = scalar_select %p44, %s43, 0
      %p46 = scmp.lt.s32.totalorder %s45, 0
      %s47 = scalar_select %p46, %s45, 0
      %s48 = smul.addr %s47, 2
      %s49 = scalar_lea.vmem %s2, %s48
      %s50 = sadd.s32 0, 0
      %p51 = scmp.lt.s32.totalorder %s50, 0
      %s52 = scalar_select %p51, %s50, 0
    $region13: #{tpu_custom_call.1} parent=1 // pred_fallthru
      _
    // Predicated region
    $region14: #{tpu_custom_call.1} parent=1 // pred_check
      _
    $region15: #{tpu_custom_call.1} parent=1 // pred_check_branch
      %54 = sbr.rel (0) target = $region17
    $region16: #{tpu_custom_call.1} parent=1 // pred_region
      %55 = dma.done [#allocation3], 32
    $region17: #{tpu_custom_call.1} parent=1 // pred_fallthru
      _
    // Predicated region
    $region18: #{tpu_custom_call.1} parent=1 // pred_check
      _
    $region19: #{tpu_custom_call.1} parent=1 // pred_check_branch
      %57 = sbr.rel (0) target = $region21
    $region20: #{tpu_custom_call.1} parent=1 // pred_region
      %58 = dma.done [#allocation6], 32
    $region21: #{tpu_custom_call.1} parent=1 // pred_fallthru
      _
    %s59 = sadd.s32 0, 0
    %p60 = scmp.lt.s32.totalorder %s59, 0
    %s61 = scalar_select %p60, %s59, 0
    %p62 = scmp.lt.s32.totalorder %s61, 0
    %s63 = scalar_select %p62, %s61, 0
    %s64 = smul.addr %s63, 2
    %s65 = scalar_lea.vmem %s2, %s64
    %s66 = sadd.s32 0, 0
    %p67 = scmp.lt.s32.totalorder %s66, 0
    %s68 = scalar_select %p67, %s66, 0
    %s69 = sadd.s32 0, 0
    %p70 = scmp.lt.s32.totalorder %s69, 0
    %s71 = scalar_select %p70, %s69, 0
    %s72 = sadd.s32 0, 0
    %p73 = scmp.lt.s32.totalorder %s72, 0
    %s74 = scalar_select %p73, %s72, 0
    %p75 = scmp.lt.s32.totalorder %s74, 0
    %s76 = scalar_select %p75, %s74, 0
    %s77 = smul.addr %s76, 2
    %s78 = scalar_lea.vmem %s2, %s77
    %s79 = sadd.s32 0, 0
    %p80 = scmp.lt.s32.totalorder %s79, 0
    %s81 = scalar_select %p80, %s79, 0
    %p82 = scmp.eq.s32.totalorder 0, 0
    // Predicated region
    $region22: #{tpu_custom_call.1} parent=1 // pred_check
      %p83 = pneg %p82
    $region23: #{tpu_custom_call.1} parent=1 // pred_check_branch
      %85 = sbr.rel (%p83) target = $region25
    $region24: #{tpu_custom_call.1} parent=1 // pred_region
      %vm86 = vcmask 90112
      %87 = vst.msk [vmem:[#allocation7] sm:$0x1] %vm86, 0.0
    $region25: #{tpu_custom_call.1} parent=1 // pred_fallthru
      _
    %v88 = vld [vmem:[#allocation2] sm:$0x3]
    %v89 = vld [vmem:[#allocation5] sm:$0x3]
    %v90 = vld [vmem:[%s78] sm:$0x3]
    %vm91 = vcmp.gt.f32.partialorder %v88, 0.0
    %v92 = vsel %vm91, %v90, 0.0
    %vm93 = vcmp.gt.f32.partialorder %v89, 0.001
    %v94 = vsel %vm93, %v89, 1.0
    %v95 = vsub.f32 %v92, %v89
    %v96 = vmul.f32 %v95, %v95
    %v97 = vrcp.pop %v94
    %v98 = vmul.f32 %v96, %v97
    %v99 = vmul.f32 %v92, %v92
    %v100 = vsel %vm93, %v98, %v99
    %s101 = sadd.s32 0, 0
    %s102 = smul.u32 %s101, 2
    %v103 = vlaneseq
    %v104 = vshrl.u32 %v103, 7
    %v105 = vstv %s102
    %v106 = vadd.s32 %v105, %v104
    %vm107 = vcmp.lt.s32.totalorder %v106, 2
    %v108 = vsel %vm107, %v100, 0.0
    %v109 = vld [vmem:[#allocation7] sm:$0x1]
    %vm110 = vcmask 91136
    %v111 = vsel %vm110, %v108, 0.0
    %v112 = vrot.slane %v111, 4
    %v113 = vadd.f32 %v111, %v112
    %v114 = vrot.slane %v113, 2
    %v115 = vadd.f32 %v113, %v114
    %v116 = vrot.slane %v115, 1
    %v117 = vadd.f32 %v115, %v116
    %v118 = vadd.f32 %v109, %v117
    %vm119 = vcmask 90112
    %120 = vst.msk [vmem:[#allocation7] sm:$0x1] %vm119, %v118
    // Predicated region
    $region26: #{tpu_custom_call.1} parent=1 // pred_check
      _
    $region27: #{tpu_custom_call.1} parent=1 // pred_check_branch
      %122 = sbr.rel (0) target = $region29
    $region28: #{tpu_custom_call.1} parent=1 // pred_region
      %s124 = ssub.s32 16, 16
      %125 = vsyncadd [#allocation4], %s124
      %s127 = sshll.u32 [#allocation7], 4
      %s128 = int_to_ptr.vmem [resolvable:$true] %s127
      %130 = dma.vmem_to_hbm [thread:$0]  %s128, 16, %s3, [#allocation4]
    $region29: #{tpu_custom_call.1} parent=1 // pred_fallthru
      _
    // Predicated region
    $region30: #{tpu_custom_call.1} parent=1 // pred_check
      _
    $region31: #{tpu_custom_call.1} parent=1 // pred_check_branch
      %132 = sbr.rel (0) target = $region33
    $region32: #{tpu_custom_call.1} parent=1 // pred_region
      %133 = dma.done [#allocation4], 16
    $region33: #{tpu_custom_call.1} parent=1 // pred_fallthru
      _
    %134 = vsyncpa [#allocation3], 1
    %135 = vsyncpa [#allocation6], 1
    %136 = vsyncpa [#allocation4], 1

</llo_original>
